<compile_context>
chip_gen: v6e
topology: v6e:2x2x1
jax: 0.10.0
libtpu: 0.0.40
codegen_flags: <defaults>
</compile_context>

<pallas_src>
import math

import jax
import jax.numpy as jnp
from jax.experimental import pallas as pl
from jax.experimental.pallas import tpu as pltpu

LANE = 128
_VMEM_BUDGET_BYTES = 24 * 1024 * 1024     # conservative: fits v7x / v5e scoped limits
_VMEM_LIMIT_BYTES = 32 * 1024 * 1024      # explicit scoped-VMEM limit (safe on all gens)


def _round_up(n, m):
    return ((n + m - 1) // m) * m


# ----------------------------------------------------------------------------- kernel
def mlp_kernel(x_ref, w1_ref, b1_ref, w2_ref, b2_ref, w3_ref, b3_ref, o_ref):
    cdt = w1_ref.dtype                       # compute dtype (bf16)
    x = x_ref[...].astype(cdt)               # in-kernel cast; no HBM pad/cast pass
    # fc1 + ReLU (bf16 operands, f32 accumulation on the MXU)
    h1 = jnp.dot(x, w1_ref[...], preferred_element_type=jnp.float32)
    h1 = jnp.maximum(h1 + b1_ref[...], 0.0).astype(cdt)   # bf16 resident intermediate
    # fc2 + ReLU
    h2 = jnp.dot(h1, w2_ref[...], preferred_element_type=jnp.float32)
    h2 = jnp.maximum(h2 + b2_ref[...], 0.0).astype(cdt)
    # fc3 (no activation), unpadded narrow output store
    out = jnp.dot(h2, w3_ref[...], preferred_element_type=jnp.float32)
    o_ref[...] = (out + b3_ref[...]).astype(o_ref.dtype)


# ------------------------------------------------------------------------ params prep
def prepare_mlp_params(w1, b1, w2, b2, w3, b3, *, compute_dtype=jnp.bfloat16):
    """One-time (init) padding + cast of weights/biases.

    w*: (in, out) f32, b*: (out,) or (1, out) f32.
    Hidden dim is padded to 128 lanes (exact: padded lanes carry zero weights and
    zero bias, so padded hidden activations stay 0 through the ReLUs).  The input
    (71) and output (8) dims are left unpadded.
    """
    K, H = w1.shape
    O = w3.shape[1]
    assert w2.shape == (H, H) and w3.shape[0] == H
    Hp = _round_up(H, LANE)

    def pad_w(a, rows, cols):
        return jnp.pad(a, ((0, rows - a.shape[0]), (0, cols - a.shape[1]))
                       ).astype(compute_dtype)

    def pad_b(a, cols):
        a = a.reshape(1, -1)
        return jnp.pad(a, ((0, 0), (0, cols - a.shape[1]))).astype(jnp.float32)

    w1p = pad_w(w1, K, Hp)
    w2p = pad_w(w2, Hp, Hp)
    w3p = pad_w(w3, Hp, O)
    b1p = pad_b(b1, Hp)
    b2p = pad_b(b2, Hp)
    b3p = pad_b(b3, O)
    return (w1p, b1p, w2p, b2p, w3p, b3p)


# -------------------------------------------------------------------------- vmem math
def _working_set_bytes(TB, K, Hp, O, x_itemsize, c_itemsize):
    x_bufs = 2 * TB * K * x_itemsize                     # double-buffered x stream
    out_bufs = 2 * TB * O * 4                            # double-buffered out stream
    interm = TB * Hp * (4 + c_itemsize) * 2              # h1/h2 (f32 acc + bf16 copy)
    weights = 2 * ((K * Hp + Hp * Hp + Hp * O) * c_itemsize + (2 * Hp + O) * 4)
    return x_bufs + out_bufs + interm + weights


# ---------------------------------------------------------------------------- forward
def mlp_forward(x, params, *, block_b=1024, core_parallel=False):
    """x: (B, K) float array. params: output of prepare_mlp_params. Returns (B, O) f32."""
    w1p, b1p, w2p, b2p, w3p, b3p = params
    B, K = x.shape
    Hp = w1p.shape[1]
    O = w3p.shape[1]
    assert w1p.shape[0] == K

    c_itemsize = jnp.dtype(w1p.dtype).itemsize
    x_itemsize = jnp.dtype(x.dtype).itemsize

    # Batch tile: big (amortize ~0.35 us/step + reach HBM roofline), bounded by VMEM.
    TB = B if B <= block_b else block_b
    while TB > 8 and _working_set_bytes(TB, K, Hp, O, x_itemsize, c_itemsize) > _VMEM_BUDGET_BYTES:
        TB = max(8, ((TB // 2) + 7) // 8 * 8)
    grid_b = pl.cdiv(B, TB)                  # ragged last block handled by masked DMAs

    # v7x: shard batch grid steps over both TensorCores when there is >1 step.
    if core_parallel and grid_b > 1:
        dim_sem = (pltpu.CORE_PARALLEL,)
    else:
        dim_sem = ("parallel",)

    resident = lambda shape: pl.BlockSpec(shape, lambda i: (0, 0))  # VMEM-resident

    return pl.pallas_call(
        mlp_kernel,
        out_shape=jax.ShapeDtypeStruct((B, O), jnp.float32),
        grid=(grid_b,),
        in_specs=[
            pl.BlockSpec((TB, K), lambda i: (i, 0)),     # x: streamed over batch, unpadded
            resident((K, Hp)),                           # w1
            resident((1, Hp)),                           # b1
            resident((Hp, Hp)),                          # w2
            resident((1, Hp)),                           # b2
            resident((Hp, O)),                           # w3
            resident((1, O)),                            # b3
        ],
        out_specs=pl.BlockSpec((TB, O), lambda i: (i, 0)),   # unpadded (B, 8) output
        compiler_params=pltpu.CompilerParams(
            dimension_semantics=dim_sem,
            vmem_limit_bytes=_VMEM_LIMIT_BYTES),
    )(x, w1p, b1p, w2p, b2p, w3p, b3p)


# ------------------------------------------------------------------------------ setup
def init_linear_params(key, in_features, out_features):
    # Mirrors torch.nn.Linear default init: U(-1/sqrt(fan_in), 1/sqrt(fan_in)).
    kw, kb = jax.random.split(key)
    bound = 1.0 / math.sqrt(in_features)
    # Stored as (in, out) — transpose of PyTorch's (out, in) weight layout.
    w = jax.random.uniform(kw, (in_features, out_features), jnp.float32, -bound, bound)
    b = jax.random.uniform(kb, (1, out_features), jnp.float32, -bound, bound)
    return w, b


def reference_forward(x, w1, b1, w2, b2, w3, b3):
    h1 = jnp.maximum(x @ w1 + b1, 0.0)
    h2 = jnp.maximum(h1 @ w2 + b2, 0.0)
    return h2 @ w3 + b3


if __name__ == "__main__":
    input_size = 71    # as in the PyTorch module
    hidden_size = 32
    output_size = 8
    batch = 8

    key = jax.random.PRNGKey(0)
    kx, k1, k2, k3, kx2 = jax.random.split(key, 5)

    x = jax.random.normal(kx, (batch, input_size), jnp.float32)
    w1, b1 = init_linear_params(k1, input_size, hidden_size)
    w2, b2 = init_linear_params(k2, hidden_size, hidden_size)
    w3, b3 = init_linear_params(k3, hidden_size, output_size)

    # Weights/biases padded + cast once, outside the hot path.
    params = prepare_mlp_params(w1, b1, w2, b2, w3, b3)

    out = mlp_forward(x, params)
    out = jax.block_until_ready(out)
    ref = reference_forward(x, w1, b1, w2, b2, w3, b3)
    assert out.shape == (batch, output_size)
    # bf16 matmul operands (incl. bf16 re-quantized h1/h2) with f32 accumulation.
    assert jnp.allclose(out, ref, atol=5e-2, rtol=5e-2), (
        f"max abs err {jnp.max(jnp.abs(out - ref))}")

    # Second check: multi-step batch grid with a ragged last block (masked DMAs).
    x2 = jax.random.normal(kx2, (300, input_size), jnp.float32)
    out2 = jax.block_until_ready(mlp_forward(x2, params, block_b=128))
    ref2 = reference_forward(x2, w1, b1, w2, b2, w3, b3)
    assert out2.shape == (300, output_size)
    assert jnp.allclose(out2, ref2, atol=5e-2, rtol=5e-2), (
        f"max abs err {jnp.max(jnp.abs(out2 - ref2))}")

    print("KERNEL_OK")
</pallas_src>

<mosaic_0001>
module attributes {stable_mosaic.version = 11 : i64} {
  func.func @mlp_kernel(%arg0: i32, %arg1: memref<8x71xf32, #tpu.memory_space<vmem>>, %arg2: memref<71x128xbf16, #tpu.memory_space<vmem>>, %arg3: memref<1x128xf32, #tpu.memory_space<vmem>>, %arg4: memref<128x128xbf16, #tpu.memory_space<vmem>>, %arg5: memref<1x128xf32, #tpu.memory_space<vmem>>, %arg6: memref<128x8xbf16, #tpu.memory_space<vmem>>, %arg7: memref<1x8xf32, #tpu.memory_space<vmem>>, %arg8: memref<8x8xf32, #tpu.memory_space<vmem>>) attributes {dimension_semantics = [#tpu.dimension_semantics<parallel>], iteration_bounds = array<i64: 1>, scalar_prefetch = 0 : i64, scratch_operands = 0 : i64, tpu.core_type = #tpu.core_type<tc>, window_params = [{transform_indices = @transform_0, window_bounds = array<i64: 8, 71>}, {pipeline_mode = #tpu.pipeline_mode<synchronous>, transform_indices = @transform_1, window_bounds = array<i64: 71, 128>}, {pipeline_mode = #tpu.pipeline_mode<synchronous>, transform_indices = @transform_2, window_bounds = array<i64: 1, 128>}, {pipeline_mode = #tpu.pipeline_mode<synchronous>, transform_indices = @transform_3, window_bounds = array<i64: 128, 128>}, {pipeline_mode = #tpu.pipeline_mode<synchronous>, transform_indices = @transform_4, window_bounds = array<i64: 1, 128>}, {pipeline_mode = #tpu.pipeline_mode<synchronous>, transform_indices = @transform_5, window_bounds = array<i64: 128, 8>}, {pipeline_mode = #tpu.pipeline_mode<synchronous>, transform_indices = @transform_6, window_bounds = array<i64: 1, 8>}, {transform_indices = @transform_7, window_bounds = array<i64: 8, 8>}]} {
    %c0 = arith.constant 0 : index
    %c0_0 = arith.constant 0 : index
    %0 = vector.load %arg1[%c0, %c0_0] : memref<8x71xf32, #tpu.memory_space<vmem>>, vector<8x71xf32>
    %1 = arith.truncf %0 : vector<8x71xf32> to vector<8x71xbf16>
    %c0_1 = arith.constant 0 : index
    %c0_2 = arith.constant 0 : index
    %2 = vector.load %arg2[%c0_1, %c0_2] : memref<71x128xbf16, #tpu.memory_space<vmem>>, vector<71x128xbf16>
    %cst = arith.constant dense<0.000000e+00> : vector<8x128xf32>
    %3 = tpu.matmul %1, %2, %cst {dimension_numbers = #tpu.dot_dimension_numbers<[1], [0], [0], [1], [0, 0, 1, 1], [], []>} : vector<8x71xbf16>, vector<71x128xbf16>, vector<8x128xf32> -> vector<8x128xf32>
    %c0_3 = arith.constant 0 : index
    %c0_4 = arith.constant 0 : index
    %4 = vector.load %arg3[%c0_3, %c0_4] : memref<1x128xf32, #tpu.memory_space<vmem>>, vector<1x128xf32>
    %5 = vector.broadcast %4 : vector<1x128xf32> to vector<8x128xf32>
    %6 = arith.addf %3, %5 : vector<8x128xf32>
    %cst_5 = arith.constant 0.000000e+00 : f32
    %7 = vector.broadcast %cst_5 : f32 to vector<8x128xf32>
    %8 = arith.maximumf %6, %7 : vector<8x128xf32>
    %9 = arith.truncf %8 : vector<8x128xf32> to vector<8x128xbf16>
    %c0_6 = arith.constant 0 : index
    %c0_7 = arith.constant 0 : index
    %10 = vector.load %arg4[%c0_6, %c0_7] : memref<128x128xbf16, #tpu.memory_space<vmem>>, vector<128x128xbf16>
    %cst_8 = arith.constant dense<0.000000e+00> : vector<8x128xf32>
    %11 = tpu.matmul %9, %10, %cst_8 {dimension_numbers = #tpu.dot_dimension_numbers<[1], [0], [0], [1], [0, 0, 1, 1], [], []>} : vector<8x128xbf16>, vector<128x128xbf16>, vector<8x128xf32> -> vector<8x128xf32>
    %c0_9 = arith.constant 0 : index
    %c0_10 = arith.constant 0 : index
    %12 = vector.load %arg5[%c0_9, %c0_10] : memref<1x128xf32, #tpu.memory_space<vmem>>, vector<1x128xf32>
    %13 = vector.broadcast %12 : vector<1x128xf32> to vector<8x128xf32>
    %14 = arith.addf %11, %13 : vector<8x128xf32>
    %cst_11 = arith.constant 0.000000e+00 : f32
    %15 = vector.broadcast %cst_11 : f32 to vector<8x128xf32>
    %16 = arith.maximumf %14, %15 : vector<8x128xf32>
    %17 = arith.truncf %16 : vector<8x128xf32> to vector<8x128xbf16>
    %c0_12 = arith.constant 0 : index
    %c0_13 = arith.constant 0 : index
    %18 = vector.load %arg6[%c0_12, %c0_13] : memref<128x8xbf16, #tpu.memory_space<vmem>>, vector<128x8xbf16>
    %cst_14 = arith.constant dense<0.000000e+00> : vector<8x8xf32>
    %19 = tpu.matmul %17, %18, %cst_14 {dimension_numbers = #tpu.dot_dimension_numbers<[1], [0], [0], [1], [0, 0, 1, 1], [], []>} : vector<8x128xbf16>, vector<128x8xbf16>, vector<8x8xf32> -> vector<8x8xf32>
    %c0_15 = arith.constant 0 : index
    %c0_16 = arith.constant 0 : index
    %20 = vector.load %arg7[%c0_15, %c0_16] : memref<1x8xf32, #tpu.memory_space<vmem>>, vector<1x8xf32>
    %21 = vector.broadcast %20 : vector<1x8xf32> to vector<8x8xf32>
    %22 = arith.addf %19, %21 : vector<8x8xf32>
    %c0_17 = arith.constant 0 : index
    %c0_18 = arith.constant 0 : index
    %23 = vector.load %arg8[%c0_17, %c0_18] : memref<8x8xf32, #tpu.memory_space<vmem>>, vector<8x8xf32>
    tpu.vector_store %arg8[%c0_17, %c0_18], %22 {strides = array<i32>} : memref<8x8xf32, #tpu.memory_space<vmem>>, vector<8x8xf32>,
    return
  }
  func.func @transform_0(%arg0: i32) -> (i32, i32) {
    %c0_i32 = arith.constant 0 : i32
    %c0_i32_0 = arith.constant 0 : i32
    return %arg0, %c0_i32 : i32, i32
  }
  func.func @transform_1(%arg0: i32) -> (i32, i32) {
    %c0_i32 = arith.constant 0 : i32
    %c0_i32_0 = arith.constant 0 : i32
    %c0_i32_1 = arith.constant 0 : i32
    return %c0_i32, %c0_i32_0 : i32, i32
  }
  func.func @transform_2(%arg0: i32) -> (i32, i32) {
    %c0_i32 = arith.constant 0 : i32
    %c0_i32_0 = arith.constant 0 : i32
    %c0_i32_1 = arith.constant 0 : i32
    return %c0_i32, %c0_i32_0 : i32, i32
  }
  func.func @transform_3(%arg0: i32) -> (i32, i32) {
    %c0_i32 = arith.constant 0 : i32
    %c0_i32_0 = arith.constant 0 : i32
    %c0_i32_1 = arith.constant 0 : i32
    return %c0_i32, %c0_i32_0 : i32, i32
  }
  func.func @transform_4(%arg0: i32) -> (i32, i32) {
    %c0_i32 = arith.constant 0 : i32
    %c0_i32_0 = arith.constant 0 : i32
    %c0_i32_1 = arith.constant 0 : i32
    return %c0_i32, %c0_i32_0 : i32, i32
  }
  func.func @transform_5(%arg0: i32) -> (i32, i32) {
    %c0_i32 = arith.constant 0 : i32
    %c0_i32_0 = arith.constant 0 : i32
    %c0_i32_1 = arith.constant 0 : i32
    return %c0_i32, %c0_i32_0 : i32, i32
  }
  func.func @transform_6(%arg0: i32) -> (i32, i32) {
    %c0_i32 = arith.constant 0 : i32
    %c0_i32_0 = arith.constant 0 : i32
    %c0_i32_1 = arith.constant 0 : i32
    return %c0_i32, %c0_i32_0 : i32, i32
  }
  func.func @transform_7(%arg0: i32) -> (i32, i32) {
    %c0_i32 = arith.constant 0 : i32
    %c0_i32_0 = arith.constant 0 : i32
    return %arg0, %c0_i32 : i32, i32
  }
}

</mosaic_0001>

<llo_original>
// kernel: tpu_custom_call.1
$region0: #{tpu_custom_call.1}
  #allocation0 [shape = 'u32[]', space=smem, size = 0x4, offset = 0x4, fixed_abs, tag = 'smem constant byte address 0x4 - core index']
  #allocation1 [shape = 'u32[144,128]{1,0:T(1,128)}', space=vmem, size = 0x12000, scoped, tag = 'internal scratch']
  %s0 = inlined_call_operand.vmem [shape: f32[8,71], index: 0, kind: input, shape index: {}]
  %s1 = inlined_call_operand.hbm [shape: bf16[71,128], index: 1, kind: input, shape index: {}]
  %s2 = inlined_call_operand.vmem [shape: f32[1,128], index: 2, kind: input, shape index: {}]
  %s3 = inlined_call_operand.vmem [shape: bf16[128,128], index: 3, kind: input, shape index: {}]
  %s4 = inlined_call_operand.hbm [shape: f32[1,128], index: 4, kind: input, shape index: {}]
  %s5 = inlined_call_operand.vmem [shape: bf16[128,8], index: 5, kind: input, shape index: {}]
  %s6 = inlined_call_operand.vmem [shape: f32[1,8], index: 6, kind: input, shape index: {}]
  %s7 = inlined_call_operand.hbm [shape: f32[8,8], index: 7, kind: output, shape index: {}]
  %s8 = sld [smem:[#allocation0]]
  $region46: #{tpu_custom_call.1} parent=0
    _
  %s10 = ssub.s32 1, %s8
  %s11 = scalar_select 0, %s10, %s8
  $region1: #{tpu_custom_call.1} parent=0
    #allocation2 [shape = 'u8[18432]{0}', space=vmem, size = 0x4800, scoped, tag = 'input window, operand 1, single buffered']
    #allocation3 [shape = 's32[1]{0}', space=sflag, size = 0x4, scoped, tag = 'scoped memory for tpu_custom_call.1']
    #allocation4 [shape = 's32[1]{0}', space=sflag, size = 0x4, scoped, tag = 'scoped memory for tpu_custom_call.1']
    #allocation5 [shape = 'u8[512]{0}', space=vmem, size = 0x400, scoped, tag = 'input window, operand 4, single buffered']
    #allocation6 [shape = 's32[1]{0}', space=sflag, size = 0x4, scoped, tag = 'scoped memory for tpu_custom_call.1']
    #allocation7 [shape = 'u8[4096]{0}', space=vmem, size = 0x1000, scoped, tag = 'output window, operand 0, single buffered']
    %12 = vsyncpa [#allocation3], 0
    %13 = vsyncpa [#allocation6], 0
    %14 = vsyncpa [#allocation4], 0
    // Predicated region
    $region2: #{tpu_custom_call.1} parent=1 // pred_check
      _
    $region3: #{tpu_custom_call.1} parent=1 // pred_check_branch
      %16 = sbr.rel (0) target = $region5
    $region4: #{tpu_custom_call.1} parent=1 // pred_region
      _
    $region5: #{tpu_custom_call.1} parent=1 // pred_fallthru
      _
    // Predicated region
    $region6: #{tpu_custom_call.1} parent=1 // pred_check
      _
    $region7: #{tpu_custom_call.1} parent=1 // pred_check_branch
      %18 = sbr.rel (0) target = $region9
    $region8: #{tpu_custom_call.1} parent=1 // pred_region
      %s20 = ssub.s32 576, 576
      %21 = vsyncadd [#allocation3], %s20
      %s22 = sshll.u32 [#allocation2], 4
      %s23 = int_to_ptr.vmem [resolvable:$true] %s22
      %28 = dma.hbm_to_vmem [thread:$0]  %s1, 576, %s23, [#allocation3], 64, 64, 4
    $region9: #{tpu_custom_call.1} parent=1 // pred_fallthru
      _
    // Predicated region
    $region10: #{tpu_custom_call.1} parent=1 // pred_check
      _
    $region11: #{tpu_custom_call.1} parent=1 // pred_check_branch
      %30 = sbr.rel (0) target = $region13
    $region12: #{tpu_custom_call.1} parent=1 // pred_region
      _
    $region13: #{tpu_custom_call.1} parent=1 // pred_fallthru
      _
    // Predicated region
    $region14: #{tpu_custom_call.1} parent=1 // pred_check
      _
    $region15: #{tpu_custom_call.1} parent=1 // pred_check_branch
      %32 = sbr.rel (0) target = $region17
    $region16: #{tpu_custom_call.1} parent=1 // pred_region
      _
    $region17: #{tpu_custom_call.1} parent=1 // pred_fallthru
      _
    // Predicated region
    $region18: #{tpu_custom_call.1} parent=1 // pred_check
      _
    $region19: #{tpu_custom_call.1} parent=1 // pred_check_branch
      %34 = sbr.rel (0) target = $region21
    $region20: #{tpu_custom_call.1} parent=1 // pred_region
      %s36 = ssub.s32 16, 16
      %37 = vsyncadd [#allocation6], %s36
      %s39 = sshll.u32 [#allocation5], 4
      %s40 = int_to_ptr.vmem [resolvable:$true] %s39
      %42 = dma.hbm_to_vmem [thread:$0]  %s4, 16, %s40, [#allocation6]
    $region21: #{tpu_custom_call.1} parent=1 // pred_fallthru
      _
    // Predicated region
    $region22: #{tpu_custom_call.1} parent=1 // pred_check
      _
    $region23: #{tpu_custom_call.1} parent=1 // pred_check_branch
      %44 = sbr.rel (0) target = $region25
    $region24: #{tpu_custom_call.1} parent=1 // pred_region
      _
    $region25: #{tpu_custom_call.1} parent=1 // pred_fallthru
      _
    // Predicated region
    $region26: #{tpu_custom_call.1} parent=1 // pred_check
      _
    $region27: #{tpu_custom_call.1} parent=1 // pred_check_branch
      %46 = sbr.rel (0) target = $region29
    $region28: #{tpu_custom_call.1} parent=1 // pred_region
      _
    $region29: #{tpu_custom_call.1} parent=1 // pred_fallthru
      _
    // Predicated region
    $region30: #{tpu_custom_call.1} parent=1 // pred_check
      _
    $region31: #{tpu_custom_call.1} parent=1 // pred_check_branch
      %48 = sbr.rel (0) target = $region33
    $region32: #{tpu_custom_call.1} parent=1 // pred_region
      %49 = dma.done [#allocation3], 576
    $region33: #{tpu_custom_call.1} parent=1 // pred_fallthru
      _
    // Predicated region
    $region34: #{tpu_custom_call.1} parent=1 // pred_check
      _
    $region35: #{tpu_custom_call.1} parent=1 // pred_check_branch
      %51 = sbr.rel (0) target = $region37
    $region36: #{tpu_custom_call.1} parent=1 // pred_region
      %52 = dma.done [#allocation6], 16
    $region37: #{tpu_custom_call.1} parent=1 // pred_fallthru
      _
    %v54 = vld [vmem:[%s0] sm:$0xff]
    %v55 = vpack.c.bf16 %v54, %v54
    %v56 = vld [vmem:[#allocation2] sm:$0xf]
    %v57 = vld [vmem:[#allocation2 + $0x4] sm:$0xf]
    %v58 = vld [vmem:[#allocation2 + $0x8] sm:$0xf]
    %v59 = vld [vmem:[#allocation2 + $0xc] sm:$0xf]
    %v60 = vld [vmem:[#allocation2 + $0x10] sm:$0xf]
    %v61 = vld [vmem:[#allocation2 + $0x14] sm:$0xf]
    %v62 = vld [vmem:[#allocation2 + $0x18] sm:$0xf]
    %v63 = vld [vmem:[#allocation2 + $0x1c] sm:$0xf]
    %v64 = vld [vmem:[#allocation2 + $0x20] sm:$0xf]
    %v65 = vld [vmem:[%s2] sm:$0x1]
    %v67 = vlaneseq
    %v68 = vshrl.u32 %v67, 7
    %v69 = vsub.s32 0, %v68
    %v70 = vrot.slane %v65, %v69
    %v81 = vunpack.c.l.b16 %v56
    %v82 = vunpack.c.l.b16 %v57
    %v83 = vunpack.c.l.b16 %v58
    %v84 = vunpack.c.l.b16 %v59
    %v85 = vunpack.c.l.b16 %v60
    %v86 = vunpack.c.l.b16 %v61
    %v87 = vunpack.c.l.b16 %v62
    %v88 = vunpack.c.l.b16 %v63
    %v89 = vunpack.c.l.b16 %v64
    %v90 = vpack.c.b16 %v82, %v81
    %v91 = vpack.c.b16 %v84, %v83
    %v92 = vpack.c.b16 %v86, %v85
    %v93 = vpack.c.b16 %v88, %v87
    %v94 = vpack.c.b16 %v89, %v89
    %vm99 = vcmask 580608
    %v101 = vsel %vm99, %v55, 0
    %vm103 = vcmask 1042432
    %vm104 = vcmask 1043456
    %v105 = vsel %vm103, 4294967295, 65535
    %v106 = vsel %vm104, %v105, 0
    %v108 = vand.u32 %v94, %v106
    %110 = vmatprep.subr.bf16.mxu0 0
    %111 = vmatpush1.bf16.msra.mxu0 0
    %112 = vmatprep.subr.bf16.mxu0 0
    %113 = vmatpush1.bf16.msra.mxu0 0
    %114 = vmatprep.subr.bf16.mxu0 0
    %115 = vmatpush1.bf16.msra.mxu0 0
    %116 = vmatprep.subr.bf16.mxu0 0
    %117 = vmatpush1.bf16.msra.mxu0 %v108
    %118 = vmatprep.subr.bf16.mxu0 0
    %119 = vmatpush1.bf16.msra.mxu0 %v93
    %120 = vmatprep.subr.bf16.mxu0 0
    %121 = vmatpush1.bf16.msra.mxu0 %v92
    %122 = vmatprep.subr.bf16.mxu0 0
    %123 = vmatpush1.bf16.msra.mxu0 %v91
    %124 = vmatprep.subr.bf16.mxu0 0
    %125 = vmatpush1.bf16.msra.mxu0 %v90
    %126 = vmatprep.subr.bf16.mxu0 0
    %127 = vmatpush2.bf16.msra.mxu0 0
    %128 = vmatprep.subr.bf16.mxu0 0
    %129 = vmatpush2.bf16.msra.mxu0 0
    %130 = vmatprep.subr.bf16.mxu0 0
    %131 = vmatpush2.bf16.msra.mxu0 0
    %132 = vmatprep.subr.bf16.mxu0 0
    %133 = vmatpush2.bf16.msra.mxu0 0
    %134 = vmatprep.subr.bf16.mxu0 0
    %135 = vmatpush2.bf16.msra.mxu0 0
    %136 = vmatprep.subr.bf16.mxu0 0
    %137 = vmatpush2.bf16.msra.mxu0 0
    %138 = vmatprep.subr.bf16.mxu0 0
    %139 = vmatpush2.bf16.msra.mxu0 0
    %140 = vmatprep.subr.bf16.mxu0 0
    %141 = vmatpush2.bf16.msra.mxu0 0
    %142 = vmatprep.mubr.bf16.mxu0 0
    %143 = vmatmul.mubr.bf16.gmra.mxu0 %v101
    %v144 = vpop.f32.mrf.mxu0
    %v145 = vadd.f32 %v70, %v144
    %v146 = vpop.f32.mrf.mxu0
    %v147 = vpop.f32.mrf.mxu0
    %v148 = vpop.f32.mrf.mxu0
    %149 = vdwg.mxu0
    %v150 = vmax.f32 %v145, 0.0
    %v151 = vpack.c.bf16 %v150, %v150
    %v152 = vld [vmem:[%s3] sm:$0xf]
    %v153 = vld [vmem:[%s3 + $0x4] sm:$0xf]
    %v154 = vld [vmem:[%s3 + $0x8] sm:$0xf]
    %v155 = vld [vmem:[%s3 + $0xc] sm:$0xf]
    %v156 = vld [vmem:[%s3 + $0x10] sm:$0xf]
    %v157 = vld [vmem:[%s3 + $0x14] sm:$0xf]
    %v158 = vld [vmem:[%s3 + $0x18] sm:$0xf]
    %v159 = vld [vmem:[%s3 + $0x1c] sm:$0xf]
    %v160 = vld [vmem:[%s3 + $0x20] sm:$0xf]
    %v161 = vld [vmem:[%s3 + $0x24] sm:$0xf]
    %v162 = vld [vmem:[%s3 + $0x28] sm:$0xf]
    %v163 = vld [vmem:[%s3 + $0x2c] sm:$0xf]
    %v164 = vld [vmem:[%s3 + $0x30] sm:$0xf]
    %v165 = vld [vmem:[%s3 + $0x34] sm:$0xf]
    %v166 = vld [vmem:[%s3 + $0x38] sm:$0xf]
    %v167 = vld [vmem:[%s3 + $0x3c] sm:$0xf]
    %v168 = vld [vmem:[#allocation5] sm:$0x1]
    %v170 = vlaneseq
    %v171 = vshrl.u32 %v170, 7
    %v172 = vsub.s32 0, %v171
    %v173 = vrot.slane %v168, %v172
    %v191 = vunpack.c.l.b16 %v152
    %v192 = vunpack.c.l.b16 %v153
    %v193 = vunpack.c.l.b16 %v154
    %v194 = vunpack.c.l.b16 %v155
    %v195 = vunpack.c.l.b16 %v156
    %v196 = vunpack.c.l.b16 %v157
    %v197 = vunpack.c.l.b16 %v158
    %v198 = vunpack.c.l.b16 %v159
    %v199 = vunpack.c.l.b16 %v160
    %v200 = vunpack.c.l.b16 %v161
    %v201 = vunpack.c.l.b16 %v162
    %v202 = vunpack.c.l.b16 %v163
    %v203 = vunpack.c.l.b16 %v164
    %v204 = vunpack.c.l.b16 %v165
    %v205 = vunpack.c.l.b16 %v166
    %v206 = vunpack.c.l.b16 %v167
    %v207 = vpack.c.b16 %v192, %v191
    %v208 = vpack.c.b16 %v194, %v193
    %v209 = vpack.c.b16 %v196, %v195
    %v210 = vpack.c.b16 %v198, %v197
    %v211 = vpack.c.b16 %v200, %v199
    %v212 = vpack.c.b16 %v202, %v201
    %v213 = vpack.c.b16 %v204, %v203
    %v214 = vpack.c.b16 %v206, %v205
    %223 = vmatprep.subr.bf16.mxu0 0
    %224 = vmatpush1.bf16.msra.mxu0 %v214
    %225 = vmatprep.subr.bf16.mxu0 0
    %226 = vmatpush1.bf16.msra.mxu0 %v213
    %227 = vmatprep.subr.bf16.mxu0 0
    %228 = vmatpush1.bf16.msra.mxu0 %v212
    %229 = vmatprep.subr.bf16.mxu0 0
    %230 = vmatpush1.bf16.msra.mxu0 %v211
    %231 = vmatprep.subr.bf16.mxu0 0
    %232 = vmatpush1.bf16.msra.mxu0 %v210
    %233 = vmatprep.subr.bf16.mxu0 0
    %234 = vmatpush1.bf16.msra.mxu0 %v209
    %235 = vmatprep.subr.bf16.mxu0 0
    %236 = vmatpush1.bf16.msra.mxu0 %v208
    %237 = vmatprep.subr.bf16.mxu0 0
    %238 = vmatpush1.bf16.msra.mxu0 %v207
    %239 = vmatprep.subr.bf16.mxu0 0
    %240 = vmatpush2.bf16.msra.mxu0 0
    %241 = vmatprep.subr.bf16.mxu0 0
    %242 = vmatpush2.bf16.msra.mxu0 0
    %243 = vmatprep.subr.bf16.mxu0 0
    %244 = vmatpush2.bf16.msra.mxu0 0
    %245 = vmatprep.subr.bf16.mxu0 0
    %246 = vmatpush2.bf16.msra.mxu0 0
    %247 = vmatprep.subr.bf16.mxu0 0
    %248 = vmatpush2.bf16.msra.mxu0 0
    %249 = vmatprep.subr.bf16.mxu0 0
    %250 = vmatpush2.bf16.msra.mxu0 0
    %251 = vmatprep.subr.bf16.mxu0 0
    %252 = vmatpush2.bf16.msra.mxu0 0
    %253 = vmatprep.subr.bf16.mxu0 0
    %254 = vmatpush2.bf16.msra.mxu0 0
    %255 = vmatprep.mubr.bf16.mxu0 0
    %256 = vmatmul.mubr.bf16.gmra.mxu0 %v151
    %v257 = vpop.f32.mrf.mxu0
    %v258 = vadd.f32 %v173, %v257
    %v259 = vpop.f32.mrf.mxu0
    %v260 = vpop.f32.mrf.mxu0
    %v261 = vpop.f32.mrf.mxu0
    %262 = vdwg.mxu0
    %v263 = vmax.f32 %v258, 0.0
    %v264 = vpack.c.bf16 %v263, %v263
    %v265 = vld [vmem:[%s5] sm:$0xf]
    %v266 = vld [vmem:[%s5 + $0x4] sm:$0xf]
    %v267 = vld [vmem:[%s5 + $0x8] sm:$0xf]
    %v268 = vld [vmem:[%s5 + $0xc] sm:$0xf]
    %v269 = vld [vmem:[%s5 + $0x10] sm:$0xf]
    %v270 = vld [vmem:[%s5 + $0x14] sm:$0xf]
    %v271 = vld [vmem:[%s5 + $0x18] sm:$0xf]
    %v272 = vld [vmem:[%s5 + $0x1c] sm:$0xf]
    %v273 = vld [vmem:[%s5 + $0x20] sm:$0xf]
    %v274 = vld [vmem:[%s5 + $0x24] sm:$0xf]
    %v275 = vld [vmem:[%s5 + $0x28] sm:$0xf]
    %v276 = vld [vmem:[%s5 + $0x2c] sm:$0xf]
    %v277 = vld [vmem:[%s5 + $0x30] sm:$0xf]
    %v278 = vld [vmem:[%s5 + $0x34] sm:$0xf]
    %v279 = vld [vmem:[%s5 + $0x38] sm:$0xf]
    %v280 = vld [vmem:[%s5 + $0x3c] sm:$0xf]
    %v281 = vld [vmem:[%s6] sm:$0x1]
    %v283 = vlaneseq
    %v284 = vshrl.u32 %v283, 7
    %v285 = vsub.s32 0, %v284
    %v286 = vrot.slane %v281, %v285
    %v304 = vunpack.c.l.b16 %v265
    %v305 = vunpack.c.l.b16 %v266
    %v306 = vunpack.c.l.b16 %v267
    %v307 = vunpack.c.l.b16 %v268
    %v308 = vunpack.c.l.b16 %v269
    %v309 = vunpack.c.l.b16 %v270
    %v310 = vunpack.c.l.b16 %v271
    %v311 = vunpack.c.l.b16 %v272
    %v312 = vunpack.c.l.b16 %v273
    %v313 = vunpack.c.l.b16 %v274
    %v314 = vunpack.c.l.b16 %v275
    %v315 = vunpack.c.l.b16 %v276
    %v316 = vunpack.c.l.b16 %v277
    %v317 = vunpack.c.l.b16 %v278
    %v318 = vunpack.c.l.b16 %v279
    %v319 = vunpack.c.l.b16 %v280
    %v320 = vpack.c.b16 %v305, %v304
    %v321 = vpack.c.b16 %v307, %v306
    %v322 = vpack.c.b16 %v309, %v308
    %v323 = vpack.c.b16 %v311, %v310
    %v324 = vpack.c.b16 %v313, %v312
    %v325 = vpack.c.b16 %v315, %v314
    %v326 = vpack.c.b16 %v317, %v316
    %v327 = vpack.c.b16 %v319, %v318
    %336 = vmatprep.subr.bf16.mxu0 0
    %337 = vmatpush1.bf16.msra.mxu0 %v327
    %338 = vmatprep.subr.bf16.mxu0 0
    %339 = vmatpush1.bf16.msra.mxu0 %v326
    %340 = vmatprep.subr.bf16.mxu0 0
    %341 = vmatpush1.bf16.msra.mxu0 %v325
    %342 = vmatprep.subr.bf16.mxu0 0
    %343 = vmatpush1.bf16.msra.mxu0 %v324
    %344 = vmatprep.subr.bf16.mxu0 0
    %345 = vmatpush1.bf16.msra.mxu0 %v323
    %346 = vmatprep.subr.bf16.mxu0 0
    %347 = vmatpush1.bf16.msra.mxu0 %v322
    %348 = vmatprep.subr.bf16.mxu0 0
    %349 = vmatpush1.bf16.msra.mxu0 %v321
    %350 = vmatprep.subr.bf16.mxu0 0
    %351 = vmatpush1.bf16.msra.mxu0 %v320
    %352 = vmatprep.subr.bf16.mxu0 0
    %353 = vmatpush2.bf16.msra.mxu0 0
    %354 = vmatprep.subr.bf16.mxu0 0
    %355 = vmatpush2.bf16.msra.mxu0 0
    %356 = vmatprep.subr.bf16.mxu0 0
    %357 = vmatpush2.bf16.msra.mxu0 0
    %358 = vmatprep.subr.bf16.mxu0 0
    %359 = vmatpush2.bf16.msra.mxu0 0
    %360 = vmatprep.subr.bf16.mxu0 0
    %361 = vmatpush2.bf16.msra.mxu0 0
    %362 = vmatprep.subr.bf16.mxu0 0
    %363 = vmatpush2.bf16.msra.mxu0 0
    %364 = vmatprep.subr.bf16.mxu0 0
    %365 = vmatpush2.bf16.msra.mxu0 0
    %366 = vmatprep.subr.bf16.mxu0 0
    %367 = vmatpush2.bf16.msra.mxu0 0
    %368 = vmatprep.mubr.bf16.mxu0 0
    %369 = vmatmul.mubr.bf16.gmra.mxu0 %v264
    %v370 = vpop.f32.mrf.mxu0
    %v371 = vadd.f32 %v286, %v370
    %v372 = vpop.f32.mrf.mxu0
    %v373 = vpop.f32.mrf.mxu0
    %v374 = vpop.f32.mrf.mxu0
    %375 = vdwg.mxu0
    %vm376 = vcmask 64512
    %377 = vst.msk [vmem:[#allocation7] sm:$0xff] %vm376, %v371
    // Predicated region
    $region38: #{tpu_custom_call.1} parent=1 // pred_check
      _
    $region39: #{tpu_custom_call.1} parent=1 // pred_check_branch
      %379 = sbr.rel (0) target = $region41
    $region40: #{tpu_custom_call.1} parent=1 // pred_region
      %s381 = ssub.s32 128, 128
      %382 = vsyncadd [#allocation4], %s381
      %s384 = sshll.u32 [#allocation7], 4
      %s385 = int_to_ptr.vmem [resolvable:$true] %s384
      %387 = dma.vmem_to_hbm [thread:$0]  %s385, 128, %s7, [#allocation4]
    $region41: #{tpu_custom_call.1} parent=1 // pred_fallthru
      _
    // Predicated region
    $region42: #{tpu_custom_call.1} parent=1 // pred_check
      _
    $region43: #{tpu_custom_call.1} parent=1 // pred_check_branch
      %389 = sbr.rel (0) target = $region45
    $region44: #{tpu_custom_call.1} parent=1 // pred_region
      %390 = dma.done [#allocation4], 128
    $region45: #{tpu_custom_call.1} parent=1 // pred_fallthru
      _
    %391 = vsyncpa [#allocation3], 1
    %392 = vsyncpa [#allocation6], 1
    %393 = vsyncpa [#allocation4], 1

</llo_original>
